<compile_context>
chip_gen: v6e
topology: v6e:2x2x1
jax: 0.10.0
libtpu: 0.0.40
codegen_flags: <defaults>
</compile_context>

<pallas_src>
import functools

import jax
import jax.numpy as jnp
from jax.experimental import pallas as pl
from jax.experimental.pallas import tpu as pltpu

_IN = 28 * 28
_N_OUT = 10
_N_PAD = 128  # lane-dense padded logit width (unmasked vector stores)


def _mlp_kernel(x_ref, w1_ref, b1_ref, w2_ref, b2_ref, w3_ref, b3_ref, out_ref):
    # f32 tile streamed from HBM; cast to bf16 on the VPU (hidden under DMA).
    x = x_ref[...].astype(jnp.bfloat16)

    # Layer 1: (TILE_B, 784) @ (784, 24) -> f32 accum -> +bias -> ReLU
    h1 = jnp.dot(x, w1_ref[...], preferred_element_type=jnp.float32)
    h1 = jnp.maximum(h1 + b1_ref[...], 0.0)

    # Layer 2: (TILE_B, 24) @ (24, 24) -> f32 accum -> +bias -> ReLU
    h2 = jnp.dot(h1.astype(jnp.bfloat16), w2_ref[...],
                 preferred_element_type=jnp.float32)
    h2 = jnp.maximum(h2 + b2_ref[...], 0.0)

    # Layer 3 (logits, lane-dense padded to 128 cols): (TILE_B, 24) @ (24, 128)
    logits = jnp.dot(h2.astype(jnp.bfloat16), w3_ref[...],
                     preferred_element_type=jnp.float32)
    out_ref[...] = (logits + b3_ref[...]).astype(out_ref.dtype)


def prepare_params(params):
    """One-time conversion of f32 params into the kernel's bf16/padded layout."""
    w1, b1, w2, b2, w3, b3 = params
    w1b = w1.astype(jnp.bfloat16)
    w2b = w2.astype(jnp.bfloat16)
    b1f = b1.reshape(1, -1).astype(jnp.float32)
    b2f = b2.reshape(1, -1).astype(jnp.float32)
    n_out = w3.shape[1]
    w3p = jnp.zeros((w3.shape[0], _N_PAD), jnp.bfloat16)
    w3p = w3p.at[:, :n_out].set(w3.astype(jnp.bfloat16))
    b3p = jnp.zeros((1, _N_PAD), jnp.float32)
    b3p = b3p.at[:, :n_out].set(b3.reshape(1, -1).astype(jnp.float32))
    return (w1b, b1f, w2b, b2f, w3p, b3p)


def _round_up(v, m):
    return ((v + m - 1) // m) * m


def _pick_tile_b(B):
    # Large tiles amortize the ~0.35 us per-grid-step overhead, but cap near
    # ceil(B/2) (rounded to a 16-row bf16 sublane multiple) so there are >= 2
    # grid steps and the "parallel" axis shards across v7x's two TensorCores.
    if B <= 16:
        return 16
    return min(2048, _round_up((B + 1) // 2, 16))


@functools.partial(jax.jit, static_argnames=("tile_b",))
def _mlp_forward_impl(x, prepped, tile_b):
    w1b, b1f, w2b, b2f, w3p, b3p = prepped
    B = x.shape[0]
    x_flat = x.reshape(B, _IN)  # torch .view(-1, 784); a bitcast under jit

    grid_b = pl.cdiv(B, tile_b)
    b_out = grid_b * tile_b  # output rows rounded up so blocks divide exactly

    const2d = lambda i: (0, 0)  # params stay VMEM-resident across grid steps

    flops = 2 * B * (_IN * 24 + 24 * 24 + 24 * _N_OUT)
    bytes_accessed = (
        B * _IN * 4                                 # f32 input stream
        + b_out * _N_PAD * 2                        # bf16 padded logits writeback
        + (_IN * 24 + 24 * 24 + 24 * _N_PAD) * 2    # bf16 weights
        + (24 + 24 + _N_PAD) * 4                    # f32 biases
    )

    out = pl.pallas_call(
        _mlp_kernel,
        out_shape=jax.ShapeDtypeStruct((b_out, _N_PAD), jnp.bfloat16),
        grid=(grid_b,),
        in_specs=[
            pl.BlockSpec((tile_b, _IN), lambda i: (i, 0)),  # streamed f32 input
            pl.BlockSpec(w1b.shape, const2d),
            pl.BlockSpec(b1f.shape, const2d),
            pl.BlockSpec(w2b.shape, const2d),
            pl.BlockSpec(b2f.shape, const2d),
            pl.BlockSpec(w3p.shape, const2d),
            pl.BlockSpec(b3p.shape, const2d),
        ],
        out_specs=pl.BlockSpec((tile_b, _N_PAD), lambda i: (i, 0)),
        compiler_params=pltpu.CompilerParams(
            dimension_semantics=("parallel",),   # megacore / v7x 2-TC sharding
            vmem_limit_bytes=48 * 1024 * 1024,   # safe on v5e/v6e/v7x at tile_b=2048
        ),
        cost_estimate=pl.CostEstimate(
            flops=flops, transcendentals=0, bytes_accessed=bytes_accessed),
    )(x_flat, w1b, b1f, w2b, b2f, w3p, b3p)

    # Slice stays fused inside this jit.  Downstream consumers (softmax/argmax)
    # should ideally consume the padded (b_out, 128) logits directly instead of
    # materializing the (B, 10) array.
    return out[:B, :_N_OUT]


def mlp_forward(x, prepped_params, tile_b=None):
    """x: (B, 1, 28, 28) or (B, 28, 28) float32. Returns (B, 10) bf16 logits."""
    if tile_b is None:
        tile_b = _pick_tile_b(x.shape[0])
    return _mlp_forward_impl(x, prepped_params, tile_b)


def init_params(key, s=(_IN, 24, 24, 10)):
    """Deterministic init mimicking torch.nn.Linear (uniform +-1/sqrt(fan_in)).
    Weights stored as (in_features, out_features); biases as (1, out)."""
    params = []
    for i in range(len(s) - 1):
        fan_in, fan_out = s[i], s[i + 1]
        key, kw, kb = jax.random.split(key, 3)
        bound = 1.0 / jnp.sqrt(jnp.float32(fan_in))
        w = jax.random.uniform(kw, (fan_in, fan_out), jnp.float32, -bound, bound)
        b = jax.random.uniform(kb, (1, fan_out), jnp.float32, -bound, bound)
        params.extend([w, b])
    return tuple(params)


if __name__ == "__main__":
    key = jax.random.PRNGKey(0)
    key, kx = jax.random.split(key)

    # Small MNIST-like batch: (B, 1, 28, 28) in [0, 1) (already "preprocessed").
    B = 8
    x = jax.random.uniform(kx, (B, 1, 28, 28), jnp.float32)

    params = init_params(key, s=(_IN, 24, 24, 10))
    prepped = prepare_params(params)  # one-time bf16/padded parameter prep

    logits = mlp_forward(x, prepped)
    logits = jax.block_until_ready(logits)

    # Pure-JAX f32 reference; kernel uses bf16 streaming + f32 accumulation and
    # a bf16 output, so compare at a bf16-appropriate tolerance.
    w1, b1, w2, b2, w3, b3 = params
    xf = x.reshape(B, _IN)
    ref = jnp.maximum(xf @ w1 + b1, 0.0)
    ref = jnp.maximum(ref @ w2 + b2, 0.0)
    ref = ref @ w3 + b3

    assert logits.shape == (B, 10)
    assert jnp.allclose(logits.astype(jnp.float32), ref, atol=2e-2, rtol=2e-2)

    print("KERNEL_OK")
</pallas_src>

<mosaic_0001>
module attributes {stable_mosaic.version = 11 : i64} {
  func.func @_mlp_kernel(%arg0: i32, %arg1: memref<16x784xf32, #tpu.memory_space<vmem>>, %arg2: memref<784x24xbf16, #tpu.memory_space<vmem>>, %arg3: memref<1x24xf32, #tpu.memory_space<vmem>>, %arg4: memref<24x24xbf16, #tpu.memory_space<vmem>>, %arg5: memref<1x24xf32, #tpu.memory_space<vmem>>, %arg6: memref<24x128xbf16, #tpu.memory_space<vmem>>, %arg7: memref<1x128xf32, #tpu.memory_space<vmem>>, %arg8: memref<16x128xbf16, #tpu.memory_space<vmem>>) attributes {dimension_semantics = [#tpu.dimension_semantics<parallel>], iteration_bounds = array<i64: 1>, scalar_prefetch = 0 : i64, scratch_operands = 0 : i64, tpu.core_type = #tpu.core_type<tc>, window_params = [{transform_indices = @transform_0, window_bounds = array<i64: 16, 784>}, {pipeline_mode = #tpu.pipeline_mode<synchronous>, transform_indices = @transform_1, window_bounds = array<i64: 784, 24>}, {pipeline_mode = #tpu.pipeline_mode<synchronous>, transform_indices = @transform_2, window_bounds = array<i64: 1, 24>}, {pipeline_mode = #tpu.pipeline_mode<synchronous>, transform_indices = @transform_3, window_bounds = array<i64: 24, 24>}, {pipeline_mode = #tpu.pipeline_mode<synchronous>, transform_indices = @transform_4, window_bounds = array<i64: 1, 24>}, {pipeline_mode = #tpu.pipeline_mode<synchronous>, transform_indices = @transform_5, window_bounds = array<i64: 24, 128>}, {pipeline_mode = #tpu.pipeline_mode<synchronous>, transform_indices = @transform_6, window_bounds = array<i64: 1, 128>}, {transform_indices = @transform_7, window_bounds = array<i64: 16, 128>}]} {
    %c0 = arith.constant 0 : index
    %c0_0 = arith.constant 0 : index
    %0 = vector.load %arg1[%c0, %c0_0] : memref<16x784xf32, #tpu.memory_space<vmem>>, vector<16x784xf32>
    %1 = arith.truncf %0 : vector<16x784xf32> to vector<16x784xbf16>
    %c0_1 = arith.constant 0 : index
    %c0_2 = arith.constant 0 : index
    %2 = vector.load %arg2[%c0_1, %c0_2] : memref<784x24xbf16, #tpu.memory_space<vmem>>, vector<784x24xbf16>
    %cst = arith.constant dense<0.000000e+00> : vector<16x24xf32>
    %3 = tpu.matmul %1, %2, %cst {dimension_numbers = #tpu.dot_dimension_numbers<[1], [0], [0], [1], [0, 0, 1, 1], [], []>} : vector<16x784xbf16>, vector<784x24xbf16>, vector<16x24xf32> -> vector<16x24xf32>
    %c0_3 = arith.constant 0 : index
    %c0_4 = arith.constant 0 : index
    %4 = vector.load %arg3[%c0_3, %c0_4] : memref<1x24xf32, #tpu.memory_space<vmem>>, vector<1x24xf32>
    %5 = vector.broadcast %4 : vector<1x24xf32> to vector<16x24xf32>
    %6 = arith.addf %3, %5 : vector<16x24xf32>
    %cst_5 = arith.constant 0.000000e+00 : f32
    %7 = vector.broadcast %cst_5 : f32 to vector<16x24xf32>
    %8 = arith.maximumf %6, %7 : vector<16x24xf32>
    %9 = arith.truncf %8 : vector<16x24xf32> to vector<16x24xbf16>
    %c0_6 = arith.constant 0 : index
    %c0_7 = arith.constant 0 : index
    %10 = vector.load %arg4[%c0_6, %c0_7] : memref<24x24xbf16, #tpu.memory_space<vmem>>, vector<24x24xbf16>
    %cst_8 = arith.constant dense<0.000000e+00> : vector<16x24xf32>
    %11 = tpu.matmul %9, %10, %cst_8 {dimension_numbers = #tpu.dot_dimension_numbers<[1], [0], [0], [1], [0, 0, 1, 1], [], []>} : vector<16x24xbf16>, vector<24x24xbf16>, vector<16x24xf32> -> vector<16x24xf32>
    %c0_9 = arith.constant 0 : index
    %c0_10 = arith.constant 0 : index
    %12 = vector.load %arg5[%c0_9, %c0_10] : memref<1x24xf32, #tpu.memory_space<vmem>>, vector<1x24xf32>
    %13 = vector.broadcast %12 : vector<1x24xf32> to vector<16x24xf32>
    %14 = arith.addf %11, %13 : vector<16x24xf32>
    %cst_11 = arith.constant 0.000000e+00 : f32
    %15 = vector.broadcast %cst_11 : f32 to vector<16x24xf32>
    %16 = arith.maximumf %14, %15 : vector<16x24xf32>
    %17 = arith.truncf %16 : vector<16x24xf32> to vector<16x24xbf16>
    %c0_12 = arith.constant 0 : index
    %c0_13 = arith.constant 0 : index
    %18 = vector.load %arg6[%c0_12, %c0_13] : memref<24x128xbf16, #tpu.memory_space<vmem>>, vector<24x128xbf16>
    %cst_14 = arith.constant dense<0.000000e+00> : vector<16x128xf32>
    %19 = tpu.matmul %17, %18, %cst_14 {dimension_numbers = #tpu.dot_dimension_numbers<[1], [0], [0], [1], [0, 0, 1, 1], [], []>} : vector<16x24xbf16>, vector<24x128xbf16>, vector<16x128xf32> -> vector<16x128xf32>
    %c0_15 = arith.constant 0 : index
    %c0_16 = arith.constant 0 : index
    %20 = vector.load %arg7[%c0_15, %c0_16] : memref<1x128xf32, #tpu.memory_space<vmem>>, vector<1x128xf32>
    %21 = vector.broadcast %20 : vector<1x128xf32> to vector<16x128xf32>
    %22 = arith.addf %19, %21 : vector<16x128xf32>
    %23 = arith.truncf %22 : vector<16x128xf32> to vector<16x128xbf16>
    %c0_17 = arith.constant 0 : index
    %c0_18 = arith.constant 0 : index
    %24 = vector.load %arg8[%c0_17, %c0_18] : memref<16x128xbf16, #tpu.memory_space<vmem>>, vector<16x128xbf16>
    tpu.vector_store %arg8[%c0_17, %c0_18], %23 {strides = array<i32>} : memref<16x128xbf16, #tpu.memory_space<vmem>>, vector<16x128xbf16>,
    return
  }
  func.func @transform_0(%arg0: i32) -> (i32, i32) {
    %c0_i32 = arith.constant 0 : i32
    %c0_i32_0 = arith.constant 0 : i32
    return %arg0, %c0_i32 : i32, i32
  }
  func.func @transform_1(%arg0: i32) -> (i32, i32) {
    %c0_i32 = arith.constant 0 : i32
    %c0_i32_0 = arith.constant 0 : i32
    %c0_i32_1 = arith.constant 0 : i32
    return %c0_i32, %c0_i32_0 : i32, i32
  }
  func.func @transform_2(%arg0: i32) -> (i32, i32) {
    %c0_i32 = arith.constant 0 : i32
    %c0_i32_0 = arith.constant 0 : i32
    %c0_i32_1 = arith.constant 0 : i32
    return %c0_i32, %c0_i32_0 : i32, i32
  }
  func.func @transform_3(%arg0: i32) -> (i32, i32) {
    %c0_i32 = arith.constant 0 : i32
    %c0_i32_0 = arith.constant 0 : i32
    %c0_i32_1 = arith.constant 0 : i32
    return %c0_i32, %c0_i32_0 : i32, i32
  }
  func.func @transform_4(%arg0: i32) -> (i32, i32) {
    %c0_i32 = arith.constant 0 : i32
    %c0_i32_0 = arith.constant 0 : i32
    %c0_i32_1 = arith.constant 0 : i32
    return %c0_i32, %c0_i32_0 : i32, i32
  }
  func.func @transform_5(%arg0: i32) -> (i32, i32) {
    %c0_i32 = arith.constant 0 : i32
    %c0_i32_0 = arith.constant 0 : i32
    %c0_i32_1 = arith.constant 0 : i32
    return %c0_i32, %c0_i32_0 : i32, i32
  }
  func.func @transform_6(%arg0: i32) -> (i32, i32) {
    %c0_i32 = arith.constant 0 : i32
    %c0_i32_0 = arith.constant 0 : i32
    %c0_i32_1 = arith.constant 0 : i32
    return %c0_i32, %c0_i32_0 : i32, i32
  }
  func.func @transform_7(%arg0: i32) -> (i32, i32) {
    %c0_i32 = arith.constant 0 : i32
    %c0_i32_0 = arith.constant 0 : i32
    return %arg0, %c0_i32 : i32, i32
  }
}

</mosaic_0001>

<llo_original>
// kernel: _mlp_forward_impl.1
$region0: #{_mlp_forward_impl.1}
  #allocation0 [shape = 'u32[]', space=smem, size = 0x4, offset = 0x4, fixed_abs, tag = 'smem constant byte address 0x4 - core index']
  #allocation1 [shape = 'u32[144,128]{1,0:T(1,128)}', space=vmem, size = 0x12000, scoped, tag = 'internal scratch']
  %s0 = inlined_call_operand.vmem [shape: f32[8,784], index: 0, kind: input, shape index: {}]
  %s1 = inlined_call_operand.vmem [shape: bf16[784,24], index: 1, kind: input, shape index: {}]
  %s2 = inlined_call_operand.vmem [shape: f32[1,24], index: 2, kind: input, shape index: {}]
  %s3 = inlined_call_operand.vmem [shape: bf16[24,24], index: 3, kind: input, shape index: {}]
  %s4 = inlined_call_operand.vmem [shape: f32[1,24], index: 4, kind: input, shape index: {}]
  %s5 = inlined_call_operand.vmem [shape: bf16[24,128], index: 5, kind: input, shape index: {}]
  %s6 = inlined_call_operand.vmem [shape: f32[1,128], index: 6, kind: input, shape index: {}]
  %s7 = inlined_call_operand.vmem [shape: bf16[16,128], index: 7, kind: output, shape index: {}]
  %s8 = sld [smem:[#allocation0]]
  $region38: #{_mlp_forward_impl.1} parent=0
    _
  %s10 = ssub.s32 1, %s8
  %s11 = scalar_select 0, %s10, %s8
  // Predicated region
  $region2: #{_mlp_forward_impl.1} parent=0 // pred_check
    _
  $region3: #{_mlp_forward_impl.1} parent=0 // pred_check_branch
    %13 = sbr.rel (0) target = $region5
  $region4: #{_mlp_forward_impl.1} parent=0 // pred_region
    _
  $region5: #{_mlp_forward_impl.1} parent=0 // pred_fallthru
    _
  // Predicated region
  $region6: #{_mlp_forward_impl.1} parent=0 // pred_check
    _
  $region7: #{_mlp_forward_impl.1} parent=0 // pred_check_branch
    %15 = sbr.rel (0) target = $region9
  $region8: #{_mlp_forward_impl.1} parent=0 // pred_region
    _
  $region9: #{_mlp_forward_impl.1} parent=0 // pred_fallthru
    _
  // Predicated region
  $region10: #{_mlp_forward_impl.1} parent=0 // pred_check
    _
  $region11: #{_mlp_forward_impl.1} parent=0 // pred_check_branch
    %17 = sbr.rel (0) target = $region13
  $region12: #{_mlp_forward_impl.1} parent=0 // pred_region
    _
  $region13: #{_mlp_forward_impl.1} parent=0 // pred_fallthru
    _
  // Predicated region
  $region14: #{_mlp_forward_impl.1} parent=0 // pred_check
    _
  $region15: #{_mlp_forward_impl.1} parent=0 // pred_check_branch
    %19 = sbr.rel (0) target = $region17
  $region16: #{_mlp_forward_impl.1} parent=0 // pred_region
    _
  $region17: #{_mlp_forward_impl.1} parent=0 // pred_fallthru
    _
  // Predicated region
  $region18: #{_mlp_forward_impl.1} parent=0 // pred_check
    _
  $region19: #{_mlp_forward_impl.1} parent=0 // pred_check_branch
    %21 = sbr.rel (0) target = $region21
  $region20: #{_mlp_forward_impl.1} parent=0 // pred_region
    _
  $region21: #{_mlp_forward_impl.1} parent=0 // pred_fallthru
    _
  // Predicated region
  $region22: #{_mlp_forward_impl.1} parent=0 // pred_check
    _
  $region23: #{_mlp_forward_impl.1} parent=0 // pred_check_branch
    %23 = sbr.rel (0) target = $region25
  $region24: #{_mlp_forward_impl.1} parent=0 // pred_region
    _
  $region25: #{_mlp_forward_impl.1} parent=0 // pred_fallthru
    _
  // Predicated region
  $region26: #{_mlp_forward_impl.1} parent=0 // pred_check
    _
  $region27: #{_mlp_forward_impl.1} parent=0 // pred_check_branch
    %25 = sbr.rel (0) target = $region29
  $region28: #{_mlp_forward_impl.1} parent=0 // pred_region
    _
  $region29: #{_mlp_forward_impl.1} parent=0 // pred_fallthru
    _
  %v27 = vld [vmem:[%s0] sm:$0xff]
  %v28 = vld [vmem:[%s0 + $0x8] sm:$0xff]
  %v29 = vld [vmem:[%s0 + $0x10] sm:$0xff]
  %v30 = vld [vmem:[%s0 + $0x18] sm:$0xff]
  %v31 = vld [vmem:[%s0 + $0x20] sm:$0xff]
  %v32 = vld [vmem:[%s0 + $0x28] sm:$0xff]
  %v33 = vld [vmem:[%s0 + $0x30] sm:$0xff]
  %v34 = vld [vmem:[%s0 + $0x38] sm:$0xff]
  %v35 = vld [vmem:[%s0 + $0x40] sm:$0xff]
  %v36 = vld [vmem:[%s0 + $0x48] sm:$0xff]
  %v37 = vld [vmem:[%s0 + $0x50] sm:$0xff]
  %v38 = vld [vmem:[%s0 + $0x58] sm:$0xff]
  %v39 = vld [vmem:[%s0 + $0x60] sm:$0xff]
  %v40 = vld [vmem:[%s0 + $0x68] sm:$0xff]
  %v41 = vpack.c.bf16 %v34, %v27
  %v42 = vpack.c.bf16 %v35, %v28
  %v43 = vpack.c.bf16 %v36, %v29
  %v44 = vpack.c.bf16 %v37, %v30
  %v45 = vpack.c.bf16 %v38, %v31
  %v46 = vpack.c.bf16 %v39, %v32
  %v47 = vpack.c.bf16 %v40, %v33
  %v48 = vld [vmem:[%s1] sm:$0xf]
  %v49 = vld [vmem:[%s1 + $0x4] sm:$0xf]
  %v50 = vld [vmem:[%s1 + $0x8] sm:$0xf]
  %v51 = vld [vmem:[%s1 + $0xc] sm:$0xf]
  %v52 = vld [vmem:[%s1 + $0x10] sm:$0xf]
  %v53 = vld [vmem:[%s1 + $0x14] sm:$0xf]
  %v54 = vld [vmem:[%s1 + $0x18] sm:$0xf]
  %v55 = vld [vmem:[%s1 + $0x1c] sm:$0xf]
  %v56 = vld [vmem:[%s1 + $0x20] sm:$0xf]
  %v57 = vld [vmem:[%s1 + $0x24] sm:$0xf]
  %v58 = vld [vmem:[%s1 + $0x28] sm:$0xf]
  %v59 = vld [vmem:[%s1 + $0x2c] sm:$0xf]
  %v60 = vld [vmem:[%s1 + $0x30] sm:$0xf]
  %v61 = vld [vmem:[%s1 + $0x34] sm:$0xf]
  %v62 = vld [vmem:[%s1 + $0x38] sm:$0xf]
  %v63 = vld [vmem:[%s1 + $0x3c] sm:$0xf]
  %v64 = vld [vmem:[%s1 + $0x40] sm:$0xf]
  %v65 = vld [vmem:[%s1 + $0x44] sm:$0xf]
  %v66 = vld [vmem:[%s1 + $0x48] sm:$0xf]
  %v67 = vld [vmem:[%s1 + $0x4c] sm:$0xf]
  %v68 = vld [vmem:[%s1 + $0x50] sm:$0xf]
  %v69 = vld [vmem:[%s1 + $0x54] sm:$0xf]
  %v70 = vld [vmem:[%s1 + $0x58] sm:$0xf]
  %v71 = vld [vmem:[%s1 + $0x5c] sm:$0xf]
  %v72 = vld [vmem:[%s1 + $0x60] sm:$0xf]
  %v73 = vld [vmem:[%s1 + $0x64] sm:$0xf]
  %v74 = vld [vmem:[%s1 + $0x68] sm:$0xf]
  %v75 = vld [vmem:[%s1 + $0x6c] sm:$0xf]
  %v76 = vld [vmem:[%s1 + $0x70] sm:$0xf]
  %v77 = vld [vmem:[%s1 + $0x74] sm:$0xf]
  %v78 = vld [vmem:[%s1 + $0x78] sm:$0xf]
  %v79 = vld [vmem:[%s1 + $0x7c] sm:$0xf]
  %v80 = vld [vmem:[%s1 + $0x80] sm:$0xf]
  %v81 = vld [vmem:[%s1 + $0x84] sm:$0xf]
  %v82 = vld [vmem:[%s1 + $0x88] sm:$0xf]
  %v83 = vld [vmem:[%s1 + $0x8c] sm:$0xf]
  %v84 = vld [vmem:[%s1 + $0x90] sm:$0xf]
  %v85 = vld [vmem:[%s1 + $0x94] sm:$0xf]
  %v86 = vld [vmem:[%s1 + $0x98] sm:$0xf]
  %v87 = vld [vmem:[%s1 + $0x9c] sm:$0xf]
  %v88 = vld [vmem:[%s1 + $0xa0] sm:$0xf]
  %v89 = vld [vmem:[%s1 + $0xa4] sm:$0xf]
  %v90 = vld [vmem:[%s1 + $0xa8] sm:$0xf]
  %v91 = vld [vmem:[%s1 + $0xac] sm:$0xf]
  %v92 = vld [vmem:[%s1 + $0xb0] sm:$0xf]
  %v93 = vld [vmem:[%s1 + $0xb4] sm:$0xf]
  %v94 = vld [vmem:[%s1 + $0xb8] sm:$0xf]
  %v95 = vld [vmem:[%s1 + $0xbc] sm:$0xf]
  %v96 = vld [vmem:[%s1 + $0xc0] sm:$0xf]
  %v97 = vld [vmem:[%s1 + $0xc4] sm:$0xf]
  %v98 = vld [vmem:[%s1 + $0xc8] sm:$0xf]
  %v99 = vld [vmem:[%s1 + $0xcc] sm:$0xf]
  %v100 = vld [vmem:[%s1 + $0xd0] sm:$0xf]
  %v101 = vld [vmem:[%s1 + $0xd4] sm:$0xf]
  %v102 = vld [vmem:[%s1 + $0xd8] sm:$0xf]
  %v103 = vld [vmem:[%s1 + $0xdc] sm:$0xf]
  %v104 = vld [vmem:[%s1 + $0xe0] sm:$0xf]
  %v105 = vld [vmem:[%s1 + $0xe4] sm:$0xf]
  %v106 = vld [vmem:[%s1 + $0xe8] sm:$0xf]
  %v107 = vld [vmem:[%s1 + $0xec] sm:$0xf]
  %v108 = vld [vmem:[%s1 + $0xf0] sm:$0xf]
  %v109 = vld [vmem:[%s1 + $0xf4] sm:$0xf]
  %v110 = vld [vmem:[%s1 + $0xf8] sm:$0xf]
  %v111 = vld [vmem:[%s1 + $0xfc] sm:$0xf]
  %v112 = vld [vmem:[%s1 + $0x100] sm:$0xf]
  %v113 = vld [vmem:[%s1 + $0x104] sm:$0xf]
  %v114 = vld [vmem:[%s1 + $0x108] sm:$0xf]
  %v115 = vld [vmem:[%s1 + $0x10c] sm:$0xf]
  %v116 = vld [vmem:[%s1 + $0x110] sm:$0xf]
  %v117 = vld [vmem:[%s1 + $0x114] sm:$0xf]
  %v118 = vld [vmem:[%s1 + $0x118] sm:$0xf]
  %v119 = vld [vmem:[%s1 + $0x11c] sm:$0xf]
  %v120 = vld [vmem:[%s1 + $0x120] sm:$0xf]
  %v121 = vld [vmem:[%s1 + $0x124] sm:$0xf]
  %v122 = vld [vmem:[%s1 + $0x128] sm:$0xf]
  %v123 = vld [vmem:[%s1 + $0x12c] sm:$0xf]
  %v124 = vld [vmem:[%s1 + $0x130] sm:$0xf]
  %v125 = vld [vmem:[%s1 + $0x134] sm:$0xf]
  %v126 = vld [vmem:[%s1 + $0x138] sm:$0xf]
  %v127 = vld [vmem:[%s1 + $0x13c] sm:$0xf]
  %v128 = vld [vmem:[%s1 + $0x140] sm:$0xf]
  %v129 = vld [vmem:[%s1 + $0x144] sm:$0xf]
  %v130 = vld [vmem:[%s1 + $0x148] sm:$0xf]
  %v131 = vld [vmem:[%s1 + $0x14c] sm:$0xf]
  %v132 = vld [vmem:[%s1 + $0x150] sm:$0xf]
  %v133 = vld [vmem:[%s1 + $0x154] sm:$0xf]
  %v134 = vld [vmem:[%s1 + $0x158] sm:$0xf]
  %v135 = vld [vmem:[%s1 + $0x15c] sm:$0xf]
  %v136 = vld [vmem:[%s1 + $0x160] sm:$0xf]
  %v137 = vld [vmem:[%s1 + $0x164] sm:$0xf]
  %v138 = vld [vmem:[%s1 + $0x168] sm:$0xf]
  %v139 = vld [vmem:[%s1 + $0x16c] sm:$0xf]
  %v140 = vld [vmem:[%s1 + $0x170] sm:$0xf]
  %v141 = vld [vmem:[%s1 + $0x174] sm:$0xf]
  %v142 = vld [vmem:[%s1 + $0x178] sm:$0xf]
  %v143 = vld [vmem:[%s1 + $0x17c] sm:$0xf]
  %v144 = vld [vmem:[%s1 + $0x180] sm:$0xf]
  %v145 = vld [vmem:[%s1 + $0x184] sm:$0xf]
  %v146 = vld [vmem:[%s2] sm:$0x1]
  %v148 = vlaneseq
  %v149 = vshrl.u32 %v148, 7
  %v150 = vsub.s32 0, %v149
  %v151 = vrot.slane %v146, %v150
  %v251 = vunpack.c.l.b16 %v48
  %v252 = vunpack.c.l.b16 %v49
  %v253 = vunpack.c.l.b16 %v50
  %v254 = vunpack.c.l.b16 %v51
  %v255 = vunpack.c.l.b16 %v52
  %v256 = vunpack.c.l.b16 %v53
  %v257 = vunpack.c.l.b16 %v54
  %v258 = vunpack.c.l.b16 %v55
  %v259 = vunpack.c.l.b16 %v56
  %v260 = vunpack.c.l.b16 %v57
  %v261 = vunpack.c.l.b16 %v58
  %v262 = vunpack.c.l.b16 %v59
  %v263 = vunpack.c.l.b16 %v60
  %v264 = vunpack.c.l.b16 %v61
  %v265 = vunpack.c.l.b16 %v62
  %v266 = vunpack.c.l.b16 %v63
  %v267 = vunpack.c.l.b16 %v64
  %v268 = vunpack.c.l.b16 %v65
  %v269 = vunpack.c.l.b16 %v66
  %v270 = vunpack.c.l.b16 %v67
  %v271 = vunpack.c.l.b16 %v68
  %v272 = vunpack.c.l.b16 %v69
  %v273 = vunpack.c.l.b16 %v70
  %v274 = vunpack.c.l.b16 %v71
  %v275 = vunpack.c.l.b16 %v72
  %v276 = vunpack.c.l.b16 %v73
  %v277 = vunpack.c.l.b16 %v74
  %v278 = vunpack.c.l.b16 %v75
  %v279 = vunpack.c.l.b16 %v76
  %v280 = vunpack.c.l.b16 %v77
  %v281 = vunpack.c.l.b16 %v78
  %v282 = vunpack.c.l.b16 %v79
  %v283 = vunpack.c.l.b16 %v80
  %v284 = vunpack.c.l.b16 %v81
  %v285 = vunpack.c.l.b16 %v82
  %v286 = vunpack.c.l.b16 %v83
  %v287 = vunpack.c.l.b16 %v84
  %v288 = vunpack.c.l.b16 %v85
  %v289 = vunpack.c.l.b16 %v86
  %v290 = vunpack.c.l.b16 %v87
  %v291 = vunpack.c.l.b16 %v88
  %v292 = vunpack.c.l.b16 %v89
  %v293 = vunpack.c.l.b16 %v90
  %v294 = vunpack.c.l.b16 %v91
  %v295 = vunpack.c.l.b16 %v92
  %v296 = vunpack.c.l.b16 %v93
  %v297 = vunpack.c.l.b16 %v94
  %v298 = vunpack.c.l.b16 %v95
  %v299 = vunpack.c.l.b16 %v96
  %v300 = vunpack.c.l.b16 %v97
  %v301 = vunpack.c.l.b16 %v98
  %v302 = vunpack.c.l.b16 %v99
  %v303 = vunpack.c.l.b16 %v100
  %v304 = vunpack.c.l.b16 %v101
  %v305 = vunpack.c.l.b16 %v102
  %v306 = vunpack.c.l.b16 %v103
  %v307 = vunpack.c.l.b16 %v104
  %v308 = vunpack.c.l.b16 %v105
  %v309 = vunpack.c.l.b16 %v106
  %v310 = vunpack.c.l.b16 %v107
  %v311 = vunpack.c.l.b16 %v108
  %v312 = vunpack.c.l.b16 %v109
  %v313 = vunpack.c.l.b16 %v110
  %v314 = vunpack.c.l.b16 %v111
  %v315 = vunpack.c.l.b16 %v112
  %v316 = vunpack.c.l.b16 %v113
  %v317 = vunpack.c.l.b16 %v114
  %v318 = vunpack.c.l.b16 %v115
  %v319 = vunpack.c.l.b16 %v116
  %v320 = vunpack.c.l.b16 %v117
  %v321 = vunpack.c.l.b16 %v118
  %v322 = vunpack.c.l.b16 %v119
  %v323 = vunpack.c.l.b16 %v120
  %v324 = vunpack.c.l.b16 %v121
  %v325 = vunpack.c.l.b16 %v122
  %v326 = vunpack.c.l.b16 %v123
  %v327 = vunpack.c.l.b16 %v124
  %v328 = vunpack.c.l.b16 %v125
  %v329 = vunpack.c.l.b16 %v126
  %v330 = vunpack.c.l.b16 %v127
  %v331 = vunpack.c.l.b16 %v128
  %v332 = vunpack.c.l.b16 %v129
  %v333 = vunpack.c.l.b16 %v130
  %v334 = vunpack.c.l.b16 %v131
  %v335 = vunpack.c.l.b16 %v132
  %v336 = vunpack.c.l.b16 %v133
  %v337 = vunpack.c.l.b16 %v134
  %v338 = vunpack.c.l.b16 %v135
  %v339 = vunpack.c.l.b16 %v136
  %v340 = vunpack.c.l.b16 %v137
  %v341 = vunpack.c.l.b16 %v138
  %v342 = vunpack.c.l.b16 %v139
  %v343 = vunpack.c.l.b16 %v140
  %v344 = vunpack.c.l.b16 %v141
  %v345 = vunpack.c.l.b16 %v142
  %v346 = vunpack.c.l.b16 %v143
  %v347 = vunpack.c.l.b16 %v144
  %v348 = vunpack.c.l.b16 %v145
  %v349 = vpack.c.b16 %v252, %v251
  %v350 = vpack.c.b16 %v254, %v253
  %v351 = vpack.c.b16 %v256, %v255
  %v352 = vpack.c.b16 %v258, %v257
  %v353 = vpack.c.b16 %v260, %v259
  %v354 = vpack.c.b16 %v262, %v261
  %v355 = vpack.c.b16 %v264, %v263
  %v356 = vpack.c.b16 %v266, %v265
  %v357 = vpack.c.b16 %v268, %v267
  %v358 = vpack.c.b16 %v270, %v269
  %v359 = vpack.c.b16 %v272, %v271
  %v360 = vpack.c.b16 %v274, %v273
  %v361 = vpack.c.b16 %v276, %v275
  %v362 = vpack.c.b16 %v278, %v277
  %v363 = vpack.c.b16 %v280, %v279
  %v364 = vpack.c.b16 %v282, %v281
  %v365 = vpack.c.b16 %v284, %v283
  %v366 = vpack.c.b16 %v286, %v285
  %v367 = vpack.c.b16 %v288, %v287
  %v368 = vpack.c.b16 %v290, %v289
  %v369 = vpack.c.b16 %v292, %v291
  %v370 = vpack.c.b16 %v294, %v293
  %v371 = vpack.c.b16 %v296, %v295
  %v372 = vpack.c.b16 %v298, %v297
  %v373 = vpack.c.b16 %v300, %v299
  %v374 = vpack.c.b16 %v302, %v301
  %v375 = vpack.c.b16 %v304, %v303
  %v376 = vpack.c.b16 %v306, %v305
  %v377 = vpack.c.b16 %v308, %v307
  %v378 = vpack.c.b16 %v310, %v309
  %v379 = vpack.c.b16 %v312, %v311
  %v380 = vpack.c.b16 %v314, %v313
  %v381 = vpack.c.b16 %v316, %v315
  %v382 = vpack.c.b16 %v318, %v317
  %v383 = vpack.c.b16 %v320, %v319
  %v384 = vpack.c.b16 %v322, %v321
  %v385 = vpack.c.b16 %v324, %v323
  %v386 = vpack.c.b16 %v326, %v325
  %v387 = vpack.c.b16 %v328, %v327
  %v388 = vpack.c.b16 %v330, %v329
  %v389 = vpack.c.b16 %v332, %v331
  %v390 = vpack.c.b16 %v334, %v333
  %v391 = vpack.c.b16 %v336, %v335
  %v392 = vpack.c.b16 %v338, %v337
  %v393 = vpack.c.b16 %v340, %v339
  %v394 = vpack.c.b16 %v342, %v341
  %v395 = vpack.c.b16 %v344, %v343
  %v396 = vpack.c.b16 %v346, %v345
  %v397 = vpack.c.b16 %v348, %v347
  %vm447 = vcmask 130048
  %v449 = vsel %vm447, %v47, 0
  %451 = vmatprep.subr.bf16.mxu0 0
  %452 = vmatpush1.bf16.msra.mxu0 %v356
  %453 = vmatprep.subr.bf16.mxu0 0
  %454 = vmatpush1.bf16.msra.mxu0 %v355
  %455 = vmatprep.subr.bf16.mxu0 0
  %456 = vmatpush1.bf16.msra.mxu0 %v354
  %457 = vmatprep.subr.bf16.mxu0 0
  %458 = vmatpush1.bf16.msra.mxu0 %v353
  %459 = vmatprep.subr.bf16.mxu0 0
  %460 = vmatpush1.bf16.msra.mxu0 %v352
  %461 = vmatprep.subr.bf16.mxu0 0
  %462 = vmatpush1.bf16.msra.mxu0 %v351
  %463 = vmatprep.subr.bf16.mxu0 0
  %464 = vmatpush1.bf16.msra.mxu0 %v350
  %465 = vmatprep.subr.bf16.mxu0 0
  %466 = vmatpush1.bf16.msra.mxu0 %v349
  %467 = vmatprep.subr.bf16.mxu0 0
  %468 = vmatpush2.bf16.msra.mxu0 %v364
  %469 = vmatprep.subr.bf16.mxu0 0
  %470 = vmatpush2.bf16.msra.mxu0 %v363
  %471 = vmatprep.subr.bf16.mxu0 0
  %472 = vmatpush2.bf16.msra.mxu0 %v362
  %473 = vmatprep.subr.bf16.mxu0 0
  %474 = vmatpush2.bf16.msra.mxu0 %v361
  %475 = vmatprep.subr.bf16.mxu0 0
  %476 = vmatpush2.bf16.msra.mxu0 %v360
  %477 = vmatprep.subr.bf16.mxu0 0
  %478 = vmatpush2.bf16.msra.mxu0 %v359
  %479 = vmatprep.subr.bf16.mxu0 0
  %480 = vmatpush2.bf16.msra.mxu0 %v358
  %481 = vmatprep.subr.bf16.mxu0 0
  %482 = vmatpush2.bf16.msra.mxu0 %v357
  %483 = vmatprep.mubr.bf16.mxu0 %v42
  %484 = vmatmul.mubr.bf16.gmra.mxu0 %v41
  %v485 = vpop.f32.mrf.mxu0
  %v486 = vadd.f32 %v151, %v485
  %v487 = vpop.f32.mrf.mxu0
  %v488 = vpop.f32.mrf.mxu0
  %v489 = vadd.f32 %v151, %v488
  %v490 = vpop.f32.mrf.mxu0
  %491 = vdwg.mxu0
  %492 = vmatprep.subr.bf16.mxu0 0
  %493 = vmatpush1.bf16.msra.mxu0 %v372
  %494 = vmatprep.subr.bf16.mxu0 0
  %495 = vmatpush1.bf16.msra.mxu0 %v371
  %496 = vmatprep.subr.bf16.mxu0 0
  %497 = vmatpush1.bf16.msra.mxu0 %v370
  %498 = vmatprep.subr.bf16.mxu0 0
  %499 = vmatpush1.bf16.msra.mxu0 %v369
  %500 = vmatprep.subr.bf16.mxu0 0
  %501 = vmatpush1.bf16.msra.mxu0 %v368
  %502 = vmatprep.subr.bf16.mxu0 0
  %503 = vmatpush1.bf16.msra.mxu0 %v367
  %504 = vmatprep.subr.bf16.mxu0 0
  %505 = vmatpush1.bf16.msra.mxu0 %v366
  %506 = vmatprep.subr.bf16.mxu0 0
  %507 = vmatpush1.bf16.msra.mxu0 %v365
  %508 = vmatprep.subr.bf16.mxu0 0
  %509 = vmatpush2.bf16.msra.mxu0 %v380
  %510 = vmatprep.subr.bf16.mxu0 0
  %511 = vmatpush2.bf16.msra.mxu0 %v379
  %512 = vmatprep.subr.bf16.mxu0 0
  %513 = vmatpush2.bf16.msra.mxu0 %v378
  %514 = vmatprep.subr.bf16.mxu0 0
  %515 = vmatpush2.bf16.msra.mxu0 %v377
  %516 = vmatprep.subr.bf16.mxu0 0
  %517 = vmatpush2.bf16.msra.mxu0 %v376
  %518 = vmatprep.subr.bf16.mxu0 0
  %519 = vmatpush2.bf16.msra.mxu0 %v375
  %520 = vmatprep.subr.bf16.mxu0 0
  %521 = vmatpush2.bf16.msra.mxu0 %v374
  %522 = vmatprep.subr.bf16.mxu0 0
  %523 = vmatpush2.bf16.msra.mxu0 %v373
  %524 = vmatprep.mubr.bf16.mxu0 %v44
  %525 = vmatmul.mubr.bf16.gmra.mxu0 %v43
  %v526 = vpop.f32.mrf.mxu0
  %v527 = vadd.f32 %v486, %v526
  %v528 = vpop.f32.mrf.mxu0
  %v529 = vpop.f32.mrf.mxu0
  %v530 = vadd.f32 %v489, %v529
  %v531 = vpop.f32.mrf.mxu0
  %532 = vdwg.mxu0
  %533 = vmatprep.subr.bf16.mxu0 0
  %534 = vmatpush1.bf16.msra.mxu0 %v388
  %535 = vmatprep.subr.bf16.mxu0 0
  %536 = vmatpush1.bf16.msra.mxu0 %v387
  %537 = vmatprep.subr.bf16.mxu0 0
  %538 = vmatpush1.bf16.msra.mxu0 %v386
  %539 = vmatprep.subr.bf16.mxu0 0
  %540 = vmatpush1.bf16.msra.mxu0 %v385
  %541 = vmatprep.subr.bf16.mxu0 0
  %542 = vmatpush1.bf16.msra.mxu0 %v384
  %543 = vmatprep.subr.bf16.mxu0 0
  %544 = vmatpush1.bf16.msra.mxu0 %v383
  %545 = vmatprep.subr.bf16.mxu0 0
  %546 = vmatpush1.bf16.msra.mxu0 %v382
  %547 = vmatprep.subr.bf16.mxu0 0
  %548 = vmatpush1.bf16.msra.mxu0 %v381
  %549 = vmatprep.subr.bf16.mxu0 0
  %550 = vmatpush2.bf16.msra.mxu0 %v396
  %551 = vmatprep.subr.bf16.mxu0 0
  %552 = vmatpush2.bf16.msra.mxu0 %v395
  %553 = vmatprep.subr.bf16.mxu0 0
  %554 = vmatpush2.bf16.msra.mxu0 %v394
  %555 = vmatprep.subr.bf16.mxu0 0
  %556 = vmatpush2.bf16.msra.mxu0 %v393
  %557 = vmatprep.subr.bf16.mxu0 0
  %558 = vmatpush2.bf16.msra.mxu0 %v392
  %559 = vmatprep.subr.bf16.mxu0 0
  %560 = vmatpush2.bf16.msra.mxu0 %v391
  %561 = vmatprep.subr.bf16.mxu0 0
  %562 = vmatpush2.bf16.msra.mxu0 %v390
  %563 = vmatprep.subr.bf16.mxu0 0
  %564 = vmatpush2.bf16.msra.mxu0 %v389
  %565 = vmatprep.mubr.bf16.mxu0 %v46
  %566 = vmatmul.mubr.bf16.gmra.mxu0 %v45
  %v567 = vpop.f32.mrf.mxu0
  %v568 = vadd.f32 %v527, %v567
  %v569 = vpop.f32.mrf.mxu0
  %v570 = vpop.f32.mrf.mxu0
  %v571 = vadd.f32 %v530, %v570
  %v572 = vpop.f32.mrf.mxu0
  %573 = vdwg.mxu0
  %574 = vmatprep.subr.bf16.mxu0 0
  %575 = vmatpush1.bf16.msra.mxu0 0
  %576 = vmatprep.subr.bf16.mxu0 0
  %577 = vmatpush1.bf16.msra.mxu0 0
  %578 = vmatprep.subr.bf16.mxu0 0
  %579 = vmatpush1.bf16.msra.mxu0 0
  %580 = vmatprep.subr.bf16.mxu0 0
  %581 = vmatpush1.bf16.msra.mxu0 0
  %582 = vmatprep.subr.bf16.mxu0 0
  %583 = vmatpush1.bf16.msra.mxu0 0
  %584 = vmatprep.subr.bf16.mxu0 0
  %585 = vmatpush1.bf16.msra.mxu0 0
  %586 = vmatprep.subr.bf16.mxu0 0
  %587 = vmatpush1.bf16.msra.mxu0 0
  %588 = vmatprep.subr.bf16.mxu0 0
  %589 = vmatpush1.bf16.msra.mxu0 %v397
  %590 = vmatprep.subr.bf16.mxu0 0
  %591 = vmatpush2.bf16.msra.mxu0 0
  %592 = vmatprep.subr.bf16.mxu0 0
  %593 = vmatpush2.bf16.msra.mxu0 0
  %594 = vmatprep.subr.bf16.mxu0 0
  %595 = vmatpush2.bf16.msra.mxu0 0
  %596 = vmatprep.subr.bf16.mxu0 0
  %597 = vmatpush2.bf16.msra.mxu0 0
  %598 = vmatprep.subr.bf16.mxu0 0
  %599 = vmatpush2.bf16.msra.mxu0 0
  %600 = vmatprep.subr.bf16.mxu0 0
  %601 = vmatpush2.bf16.msra.mxu0 0
  %602 = vmatprep.subr.bf16.mxu0 0
  %603 = vmatpush2.bf16.msra.mxu0 0
  %604 = vmatprep.subr.bf16.mxu0 0
  %605 = vmatpush2.bf16.msra.mxu0 0
  %606 = vmatprep.mubr.bf16.mxu0 0
  %607 = vmatmul.mubr.bf16.gmra.mxu0 %v449
  %v608 = vpop.f32.mrf.mxu0
  %v609 = vadd.f32 %v568, %v608
  %v610 = vpop.f32.mrf.mxu0
  %v611 = vpop.f32.mrf.mxu0
  %v612 = vadd.f32 %v571, %v611
  %v613 = vpop.f32.mrf.mxu0
  %614 = vdwg.mxu0
  %v615 = vmax.f32 %v609, 0.0
  %v616 = vmax.f32 %v612, 0.0
  %v617 = vpack.c.bf16 %v616, %v615
  %v618 = vld [vmem:[%s3] sm:$0xf]
  %v619 = vld [vmem:[%s3 + $0x4] sm:$0xf]
  %v620 = vld [vmem:[%s3 + $0x8] sm:$0xf]
  %v621 = vld [vmem:[%s4] sm:$0x1]
  %v623 = vlaneseq
  %v624 = vshrl.u32 %v623, 7
  %v625 = vsub.s32 0, %v624
  %v626 = vrot.slane %v621, %v625
  %v631 = vunpack.c.l.b16 %v618
  %v632 = vunpack.c.l.b16 %v619
  %v633 = vunpack.c.l.b16 %v620
  %v634 = vpack.c.b16 %v632, %v631
  %v635 = vpack.c.b16 %v633, %v633
  %vm637 = vcmask 195584
  %v639 = vsel %vm637, %v617, 0
  %vm641 = vcmask 1043456
  %v643 = vsel %vm641, %v635, 0
  %645 = vmatprep.subr.bf16.mxu0 0
  %646 = vmatpush1.bf16.msra.mxu0 0
  %647 = vmatprep.subr.bf16.mxu0 0
  %648 = vmatpush1.bf16.msra.mxu0 0
  %649 = vmatprep.subr.bf16.mxu0 0
  %650 = vmatpush1.bf16.msra.mxu0 0
  %651 = vmatprep.subr.bf16.mxu0 0
  %652 = vmatpush1.bf16.msra.mxu0 0
  %653 = vmatprep.subr.bf16.mxu0 0
  %654 = vmatpush1.bf16.msra.mxu0 0
  %655 = vmatprep.subr.bf16.mxu0 0
  %656 = vmatpush1.bf16.msra.mxu0 0
  %657 = vmatprep.subr.bf16.mxu0 0
  %658 = vmatpush1.bf16.msra.mxu0 %v643
  %659 = vmatprep.subr.bf16.mxu0 0
  %660 = vmatpush1.bf16.msra.mxu0 %v634
  %661 = vmatprep.subr.bf16.mxu0 0
  %662 = vmatpush2.bf16.msra.mxu0 0
  %663 = vmatprep.subr.bf16.mxu0 0
  %664 = vmatpush2.bf16.msra.mxu0 0
  %665 = vmatprep.subr.bf16.mxu0 0
  %666 = vmatpush2.bf16.msra.mxu0 0
  %667 = vmatprep.subr.bf16.mxu0 0
  %668 = vmatpush2.bf16.msra.mxu0 0
  %669 = vmatprep.subr.bf16.mxu0 0
  %670 = vmatpush2.bf16.msra.mxu0 0
  %671 = vmatprep.subr.bf16.mxu0 0
  %672 = vmatpush2.bf16.msra.mxu0 0
  %673 = vmatprep.subr.bf16.mxu0 0
  %674 = vmatpush2.bf16.msra.mxu0 0
  %675 = vmatprep.subr.bf16.mxu0 0
  %676 = vmatpush2.bf16.msra.mxu0 0
  %677 = vmatprep.mubr.bf16.mxu0 0
  %678 = vmatmul.mubr.bf16.gmra.mxu0 %v639
  %v679 = vpop.f32.mrf.mxu0
  %v680 = vadd.f32 %v626, %v679
  %v681 = vpop.f32.mrf.mxu0
  %v682 = vpop.f32.mrf.mxu0
  %v683 = vadd.f32 %v626, %v682
  %v684 = vpop.f32.mrf.mxu0
  %685 = vdwg.mxu0
  %v686 = vmax.f32 %v680, 0.0
  %v687 = vmax.f32 %v683, 0.0
  %v688 = vpack.c.bf16 %v687, %v686
  %v689 = vld [vmem:[%s5] sm:$0xf]
  %v690 = vld [vmem:[%s5 + $0x4] sm:$0xf]
  %v691 = vld [vmem:[%s5 + $0x8] sm:$0xf]
  %v692 = vld [vmem:[%s6] sm:$0x1]
  %v694 = vlaneseq
  %v695 = vshrl.u32 %v694, 7
  %v696 = vsub.s32 0, %v695
  %v697 = vrot.slane %v692, %v696
  %v702 = vunpack.c.l.b16 %v689
  %v703 = vunpack.c.l.b16 %v690
  %v704 = vunpack.c.l.b16 %v691
  %v705 = vpack.c.b16 %v703, %v702
  %v706 = vpack.c.b16 %v704, %v704
  %v709 = vsel %vm637, %v688, 0
  %v712 = vsel %vm641, %v706, 0
  %714 = vmatprep.subr.bf16.mxu0 0
  %715 = vmatpush1.bf16.msra.mxu0 0
  %716 = vmatprep.subr.bf16.mxu0 0
  %717 = vmatpush1.bf16.msra.mxu0 0
  %718 = vmatprep.subr.bf16.mxu0 0
  %719 = vmatpush1.bf16.msra.mxu0 0
  %720 = vmatprep.subr.bf16.mxu0 0
  %721 = vmatpush1.bf16.msra.mxu0 0
  %722 = vmatprep.subr.bf16.mxu0 0
  %723 = vmatpush1.bf16.msra.mxu0 0
  %724 = vmatprep.subr.bf16.mxu0 0
  %725 = vmatpush1.bf16.msra.mxu0 0
  %726 = vmatprep.subr.bf16.mxu0 0
  %727 = vmatpush1.bf16.msra.mxu0 %v712
  %728 = vmatprep.subr.bf16.mxu0 0
  %729 = vmatpush1.bf16.msra.mxu0 %v705
  %730 = vmatprep.subr.bf16.mxu0 0
  %731 = vmatpush2.bf16.msra.mxu0 0
  %732 = vmatprep.subr.bf16.mxu0 0
  %733 = vmatpush2.bf16.msra.mxu0 0
  %734 = vmatprep.subr.bf16.mxu0 0
  %735 = vmatpush2.bf16.msra.mxu0 0
  %736 = vmatprep.subr.bf16.mxu0 0
  %737 = vmatpush2.bf16.msra.mxu0 0
  %738 = vmatprep.subr.bf16.mxu0 0
  %739 = vmatpush2.bf16.msra.mxu0 0
  %740 = vmatprep.subr.bf16.mxu0 0
  %741 = vmatpush2.bf16.msra.mxu0 0
  %742 = vmatprep.subr.bf16.mxu0 0
  %743 = vmatpush2.bf16.msra.mxu0 0
  %744 = vmatprep.subr.bf16.mxu0 0
  %745 = vmatpush2.bf16.msra.mxu0 0
  %746 = vmatprep.mubr.bf16.mxu0 0
  %747 = vmatmul.mubr.bf16.gmra.mxu0 %v709
  %v748 = vpop.f32.mrf.mxu0
  %v749 = vadd.f32 %v697, %v748
  %v750 = vpop.f32.mrf.mxu0
  %v751 = vpop.f32.mrf.mxu0
  %v752 = vadd.f32 %v697, %v751
  %v753 = vpop.f32.mrf.mxu0
  %754 = vdwg.mxu0
  %v755 = vpack.c.bf16 %v752, %v749
  %v757 = vunpack.c.l.b16 %v755
  %v758 = vunpack.c.h.b16 %v755
  %v759 = vpack.c.b16 %v757, %v757
  %v760 = vpack.c.b16 %v758, %v758
  %763 = vst [vmem:[%s7] sm:$0xf] %v759
  %764 = vst [vmem:[%s7 + $0x4] sm:$0xf] %v760
  // Predicated region
  $region30: #{_mlp_forward_impl.1} parent=0 // pred_check
    _
  $region31: #{_mlp_forward_impl.1} parent=0 // pred_check_branch
    %766 = sbr.rel (0) target = $region33
  $region32: #{_mlp_forward_impl.1} parent=0 // pred_region
    _
  $region33: #{_mlp_forward_impl.1} parent=0 // pred_fallthru
    _
  // Predicated region
  $region34: #{_mlp_forward_impl.1} parent=0 // pred_check
    _
  $region35: #{_mlp_forward_impl.1} parent=0 // pred_check_branch
    %768 = sbr.rel (0) target = $region37
  $region36: #{_mlp_forward_impl.1} parent=0 // pred_region
    _
  $region37: #{_mlp_forward_impl.1} parent=0 // pred_fallthru
    _

</llo_original>
